<compile_context>
chip_gen: v6e
topology: v6e:2x2x1
jax: 0.10.0
libtpu: 0.0.40
codegen_flags: <defaults>
</compile_context>

<pallas_src>
import jax
import jax.numpy as jnp
from jax.experimental import pallas as pl
from jax.experimental.pallas import tpu as pltpu

EMB_DIM = 16          # fc3 output width = 256 (lane-dense, multiple of 128)
HIDDEN = 128
META_DIM = 8          # unused by forward(); kept only for signature parity


def _round_up(n, m):
    return ((n + m - 1) // m) * m


# -----------------------------------------------------------------------------
# Single fused Pallas kernel: fc1 -> PReLU -> fc2 -> PReLU -> fc3
# (one (TB, emb) row-tile of x in, one (TB, emb*emb) row-tile of the output out)
# -----------------------------------------------------------------------------
def _generator_kernel(x_ref, w1_ref, b1_ref, w2_ref, b2_ref, w3_ref, b3_ref,
                      alpha_ref, o_ref):
    a = alpha_ref[0]                                   # shared PReLU slope (SMEM scalar)

    # fc1: bf16 operands on the MXU, f32 accumulate; bias + PReLU in f32 on the VPU.
    x = x_ref[...].astype(jnp.bfloat16)
    h = jnp.dot(x, w1_ref[...], preferred_element_type=jnp.float32) + b1_ref[...]
    h = jnp.where(h > 0.0, h, a * h)                   # PReLU (num_parameters=1)

    # fc2
    h = jnp.dot(h.astype(jnp.bfloat16), w2_ref[...],
                preferred_element_type=jnp.float32) + b2_ref[...]
    h = jnp.where(h > 0.0, h, a * h)                   # same shared alpha

    # fc3
    y = jnp.dot(h.astype(jnp.bfloat16), w3_ref[...],
                preferred_element_type=jnp.float32) + b3_ref[...]
    o_ref[...] = y.astype(o_ref.dtype)


def generator_forward(x, params, *, block_rows=512):
    """x: (batch, ...) -> nn.Flatten -> (batch, emb_dim); returns (batch, emb_dim**2)."""
    B = x.shape[0]
    x2d = x.reshape(B, -1)                             # nn.Flatten()
    if x2d.dtype != jnp.float32:
        x2d = x2d.astype(jnp.float32)

    emb = x2d.shape[1]
    hid = params["w1"].shape[1]
    out_dim = params["w3"].shape[1]

    # Row tile: multiple of 8 sublanes, capped at block_rows; pad batch to a multiple.
    tb = min(block_rows, _round_up(B, 8))
    bp = _round_up(B, tb)
    if bp != B:
        x2d = jnp.pad(x2d, ((0, bp - B), (0, 0)))

    full = lambda i: (0, 0)                            # weights/biases: constant block index
    out = pl.pallas_call(
        _generator_kernel,
        out_shape=jax.ShapeDtypeStruct((bp, out_dim), jnp.float32),
        grid=(bp // tb,),
        in_specs=[
            pl.BlockSpec((tb, emb), lambda i: (i, 0)),                     # x tile (pipelined)
            pl.BlockSpec((emb, hid), full),                                # w1 (bf16, resident)
            pl.BlockSpec((1, hid), full),                                  # b1
            pl.BlockSpec((hid, hid), full),                                # w2 (bf16, resident)
            pl.BlockSpec((1, hid), full),                                  # b2
            pl.BlockSpec((hid, out_dim), full),                            # w3 (bf16, resident)
            pl.BlockSpec((1, out_dim), full),                              # b3
            pl.BlockSpec(memory_space=pltpu.MemorySpace.SMEM),             # alpha scalar
        ],
        out_specs=pl.BlockSpec((tb, out_dim), lambda i: (i, 0)),
        compiler_params=pltpu.CompilerParams(
            dimension_semantics=("parallel",),          # v7x: shard batch tiles over 2 TCs
            vmem_limit_bytes=32 * 1024 * 1024,          # safe under v7x 64 MiB VMEM
        ),
    )(x2d, params["w1"], params["b1"], params["w2"], params["b2"],
      params["w3"], params["b3"], params["alpha"])

    return out[:B] if bp != B else out


# -----------------------------------------------------------------------------
# Deterministic synthetic parameters ((in, out) weight layout) + references.
# Note: real PyTorch checkpoints store Linear weights as (out, in) -> transpose on load.
# -----------------------------------------------------------------------------
def _init_linear(key, fan_in, fan_out, scale=0.1):
    kw, kb = jax.random.split(key)
    w = (jax.random.normal(kw, (fan_in, fan_out), jnp.float32) * scale).astype(jnp.bfloat16)
    b = jax.random.normal(kb, (1, fan_out), jnp.float32) * scale
    return w, b


def init_generator_params(key, emb_dim):
    k1, k2, k3 = jax.random.split(key, 3)
    w1, b1 = _init_linear(k1, emb_dim, HIDDEN)
    w2, b2 = _init_linear(k2, HIDDEN, HIDDEN)
    w3, b3 = _init_linear(k3, HIDDEN, emb_dim * emb_dim)
    alpha = jnp.full((1,), 0.25, jnp.float32)          # PReLU default init
    return dict(w1=w1, b1=b1, w2=w2, b2=b2, w3=w3, b3=b3, alpha=alpha)


def _reference_forward(x, params):
    """Matched-precision reference: bf16 dot operands, f32 accumulate/elementwise."""
    x2d = x.reshape(x.shape[0], -1).astype(jnp.float32)
    a = params["alpha"][0]
    h = jnp.dot(x2d.astype(jnp.bfloat16), params["w1"],
                preferred_element_type=jnp.float32) + params["b1"]
    h = jnp.where(h > 0.0, h, a * h)
    h = jnp.dot(h.astype(jnp.bfloat16), params["w2"],
                preferred_element_type=jnp.float32) + params["b2"]
    h = jnp.where(h > 0.0, h, a * h)
    return jnp.dot(h.astype(jnp.bfloat16), params["w3"],
                   preferred_element_type=jnp.float32) + params["b3"]


def _reference_forward_f32(x, params):
    """Full-f32 reference (module semantics); used with a looser tolerance."""
    x2d = x.reshape(x.shape[0], -1).astype(jnp.float32)
    a = params["alpha"][0]
    h = x2d @ params["w1"].astype(jnp.float32) + params["b1"]
    h = jnp.where(h > 0.0, h, a * h)
    h = h @ params["w2"].astype(jnp.float32) + params["b2"]
    h = jnp.where(h > 0.0, h, a * h)
    return h @ params["w3"].astype(jnp.float32) + params["b3"]


# -----------------------------------------------------------------------------
if __name__ == "__main__":
    batch = 8

    key = jax.random.PRNGKey(0)
    kx, kp = jax.random.split(key)

    # (batch, 4, 4) flattens to emb_dim = 16, exercising nn.Flatten().
    x = jax.random.normal(kx, (batch, 4, 4), jnp.float32)
    params = init_generator_params(kp, EMB_DIM)

    fwd = jax.jit(generator_forward)
    out = fwd(x, params)
    jax.block_until_ready(out)

    assert out.shape == (batch, EMB_DIM * EMB_DIM)
    assert bool(jnp.all(jnp.isfinite(out)))

    ref = _reference_forward(x, params)
    max_err = float(jnp.max(jnp.abs(out - ref)))
    assert jnp.allclose(out, ref, rtol=1e-3, atol=1e-3), max_err

    ref32 = _reference_forward_f32(x, params)
    max_err32 = float(jnp.max(jnp.abs(out - ref32)))
    assert jnp.allclose(out, ref32, rtol=5e-2, atol=5e-2), max_err32

    # Exercise the row-padding / grid path with a batch that is not a multiple of 8.
    x_odd = jax.random.normal(jax.random.PRNGKey(1), (10, 4, 4), jnp.float32)
    out_odd = jax.block_until_ready(fwd(x_odd, params))
    ref_odd = _reference_forward(x_odd, params)
    assert out_odd.shape == (10, EMB_DIM * EMB_DIM)
    assert jnp.allclose(out_odd, ref_odd, rtol=1e-3, atol=1e-3)

    print("KERNEL_OK")
</pallas_src>

<mosaic_0001>
module attributes {stable_mosaic.version = 11 : i64} {
  func.func @_generator_kernel(%arg0: i32, %arg1: memref<8x16xf32, #tpu.memory_space<vmem>>, %arg2: memref<16x128xbf16, #tpu.memory_space<vmem>>, %arg3: memref<1x128xf32, #tpu.memory_space<vmem>>, %arg4: memref<128x128xbf16, #tpu.memory_space<vmem>>, %arg5: memref<1x128xf32, #tpu.memory_space<vmem>>, %arg6: memref<128x256xbf16, #tpu.memory_space<vmem>>, %arg7: memref<1x256xf32, #tpu.memory_space<vmem>>, %arg8: memref<1xf32, #tpu.memory_space<smem>>, %arg9: memref<8x256xf32, #tpu.memory_space<vmem>>) attributes {dimension_semantics = [#tpu.dimension_semantics<parallel>], iteration_bounds = array<i64: 1>, scalar_prefetch = 0 : i64, scratch_operands = 0 : i64, tpu.core_type = #tpu.core_type<tc>, window_params = [{transform_indices = @transform_0, window_bounds = array<i64: 8, 16>}, {pipeline_mode = #tpu.pipeline_mode<synchronous>, transform_indices = @transform_1, window_bounds = array<i64: 16, 128>}, {pipeline_mode = #tpu.pipeline_mode<synchronous>, transform_indices = @transform_2, window_bounds = array<i64: 1, 128>}, {pipeline_mode = #tpu.pipeline_mode<synchronous>, transform_indices = @transform_3, window_bounds = array<i64: 128, 128>}, {pipeline_mode = #tpu.pipeline_mode<synchronous>, transform_indices = @transform_4, window_bounds = array<i64: 1, 128>}, {pipeline_mode = #tpu.pipeline_mode<synchronous>, transform_indices = @transform_5, window_bounds = array<i64: 128, 256>}, {pipeline_mode = #tpu.pipeline_mode<synchronous>, transform_indices = @transform_6, window_bounds = array<i64: 1, 256>}, {transform_indices = @transform_7, window_bounds = array<i64: 1>}, {transform_indices = @transform_8, window_bounds = array<i64: 8, 256>}]} {
    %c0 = arith.constant 0 : index
    %0 = memref.load %arg8[%c0] : memref<1xf32, #tpu.memory_space<smem>>
    %c0_0 = arith.constant 0 : index
    %c0_1 = arith.constant 0 : index
    %1 = vector.load %arg1[%c0_0, %c0_1] : memref<8x16xf32, #tpu.memory_space<vmem>>, vector<8x16xf32>
    %2 = arith.truncf %1 : vector<8x16xf32> to vector<8x16xbf16>
    %c0_2 = arith.constant 0 : index
    %c0_3 = arith.constant 0 : index
    %3 = vector.load %arg2[%c0_2, %c0_3] : memref<16x128xbf16, #tpu.memory_space<vmem>>, vector<16x128xbf16>
    %cst = arith.constant dense<0.000000e+00> : vector<8x128xf32>
    %4 = tpu.matmul %2, %3, %cst {dimension_numbers = #tpu.dot_dimension_numbers<[1], [0], [0], [1], [0, 0, 1, 1], [], []>} : vector<8x16xbf16>, vector<16x128xbf16>, vector<8x128xf32> -> vector<8x128xf32>
    %c0_4 = arith.constant 0 : index
    %c0_5 = arith.constant 0 : index
    %5 = vector.load %arg3[%c0_4, %c0_5] : memref<1x128xf32, #tpu.memory_space<vmem>>, vector<1x128xf32>
    %6 = vector.broadcast %5 : vector<1x128xf32> to vector<8x128xf32>
    %7 = arith.addf %4, %6 : vector<8x128xf32>
    %cst_6 = arith.constant 0.000000e+00 : f32
    %8 = vector.broadcast %cst_6 : f32 to vector<8x128xf32>
    %9 = arith.cmpf ogt, %7, %8 : vector<8x128xf32>
    %10 = vector.broadcast %0 : f32 to vector<8x128xf32>
    %11 = arith.mulf %10, %7 : vector<8x128xf32>
    %12 = arith.select %9, %7, %11 : vector<8x128xi1>, vector<8x128xf32>
    %13 = arith.truncf %12 : vector<8x128xf32> to vector<8x128xbf16>
    %c0_7 = arith.constant 0 : index
    %c0_8 = arith.constant 0 : index
    %14 = vector.load %arg4[%c0_7, %c0_8] : memref<128x128xbf16, #tpu.memory_space<vmem>>, vector<128x128xbf16>
    %cst_9 = arith.constant dense<0.000000e+00> : vector<8x128xf32>
    %15 = tpu.matmul %13, %14, %cst_9 {dimension_numbers = #tpu.dot_dimension_numbers<[1], [0], [0], [1], [0, 0, 1, 1], [], []>} : vector<8x128xbf16>, vector<128x128xbf16>, vector<8x128xf32> -> vector<8x128xf32>
    %c0_10 = arith.constant 0 : index
    %c0_11 = arith.constant 0 : index
    %16 = vector.load %arg5[%c0_10, %c0_11] : memref<1x128xf32, #tpu.memory_space<vmem>>, vector<1x128xf32>
    %17 = vector.broadcast %16 : vector<1x128xf32> to vector<8x128xf32>
    %18 = arith.addf %15, %17 : vector<8x128xf32>
    %cst_12 = arith.constant 0.000000e+00 : f32
    %19 = vector.broadcast %cst_12 : f32 to vector<8x128xf32>
    %20 = arith.cmpf ogt, %18, %19 : vector<8x128xf32>
    %21 = vector.broadcast %0 : f32 to vector<8x128xf32>
    %22 = arith.mulf %21, %18 : vector<8x128xf32>
    %23 = arith.select %20, %18, %22 : vector<8x128xi1>, vector<8x128xf32>
    %24 = arith.truncf %23 : vector<8x128xf32> to vector<8x128xbf16>
    %c0_13 = arith.constant 0 : index
    %c0_14 = arith.constant 0 : index
    %25 = vector.load %arg6[%c0_13, %c0_14] : memref<128x256xbf16, #tpu.memory_space<vmem>>, vector<128x256xbf16>
    %cst_15 = arith.constant dense<0.000000e+00> : vector<8x256xf32>
    %26 = tpu.matmul %24, %25, %cst_15 {dimension_numbers = #tpu.dot_dimension_numbers<[1], [0], [0], [1], [0, 0, 1, 1], [], []>} : vector<8x128xbf16>, vector<128x256xbf16>, vector<8x256xf32> -> vector<8x256xf32>
    %c0_16 = arith.constant 0 : index
    %c0_17 = arith.constant 0 : index
    %27 = vector.load %arg7[%c0_16, %c0_17] : memref<1x256xf32, #tpu.memory_space<vmem>>, vector<1x256xf32>
    %28 = vector.broadcast %27 : vector<1x256xf32> to vector<8x256xf32>
    %29 = arith.addf %26, %28 : vector<8x256xf32>
    %c0_18 = arith.constant 0 : index
    %c0_19 = arith.constant 0 : index
    %30 = vector.load %arg9[%c0_18, %c0_19] : memref<8x256xf32, #tpu.memory_space<vmem>>, vector<8x256xf32>
    tpu.vector_store %arg9[%c0_18, %c0_19], %29 {strides = array<i32>} : memref<8x256xf32, #tpu.memory_space<vmem>>, vector<8x256xf32>,
    return
  }
  func.func @transform_0(%arg0: i32) -> (i32, i32) {
    %c0_i32 = arith.constant 0 : i32
    %c0_i32_0 = arith.constant 0 : i32
    return %arg0, %c0_i32 : i32, i32
  }
  func.func @transform_1(%arg0: i32) -> (i32, i32) {
    %c0_i32 = arith.constant 0 : i32
    %c0_i32_0 = arith.constant 0 : i32
    %c0_i32_1 = arith.constant 0 : i32
    return %c0_i32, %c0_i32_0 : i32, i32
  }
  func.func @transform_2(%arg0: i32) -> (i32, i32) {
    %c0_i32 = arith.constant 0 : i32
    %c0_i32_0 = arith.constant 0 : i32
    %c0_i32_1 = arith.constant 0 : i32
    return %c0_i32, %c0_i32_0 : i32, i32
  }
  func.func @transform_3(%arg0: i32) -> (i32, i32) {
    %c0_i32 = arith.constant 0 : i32
    %c0_i32_0 = arith.constant 0 : i32
    %c0_i32_1 = arith.constant 0 : i32
    return %c0_i32, %c0_i32_0 : i32, i32
  }
  func.func @transform_4(%arg0: i32) -> (i32, i32) {
    %c0_i32 = arith.constant 0 : i32
    %c0_i32_0 = arith.constant 0 : i32
    %c0_i32_1 = arith.constant 0 : i32
    return %c0_i32, %c0_i32_0 : i32, i32
  }
  func.func @transform_5(%arg0: i32) -> (i32, i32) {
    %c0_i32 = arith.constant 0 : i32
    %c0_i32_0 = arith.constant 0 : i32
    %c0_i32_1 = arith.constant 0 : i32
    return %c0_i32, %c0_i32_0 : i32, i32
  }
  func.func @transform_6(%arg0: i32) -> (i32, i32) {
    %c0_i32 = arith.constant 0 : i32
    %c0_i32_0 = arith.constant 0 : i32
    %c0_i32_1 = arith.constant 0 : i32
    return %c0_i32, %c0_i32_0 : i32, i32
  }
  func.func @transform_7(%arg0: i32) -> i32 {
    %c0_i32 = arith.constant 0 : i32
    %c0_i32_0 = arith.constant 0 : i32
    return %c0_i32 : i32
  }
  func.func @transform_8(%arg0: i32) -> (i32, i32) {
    %c0_i32 = arith.constant 0 : i32
    %c0_i32_0 = arith.constant 0 : i32
    return %arg0, %c0_i32 : i32, i32
  }
}

</mosaic_0001>

<llo_original>
// kernel: generator_forward.1
$region0: #{generator_forward.1}
  #allocation0 [shape = 'u32[]', space=smem, size = 0x4, offset = 0x4, fixed_abs, tag = 'smem constant byte address 0x4 - core index']
  #allocation1 [shape = 'u32[144,128]{1,0:T(1,128)}', space=vmem, size = 0x12000, scoped, tag = 'internal scratch']
  #allocation2 [shape = 'f32[1]{0:T(128)S(6)}', space=smem, size = 0x200, scoped, tag = 'scoped memory for generator_forward.1']
  %s0 = inlined_call_operand.vmem [shape: f32[8,16], index: 0, kind: input, shape index: {}]
  %s1 = inlined_call_operand.vmem [shape: bf16[16,128], index: 1, kind: input, shape index: {}]
  %s2 = inlined_call_operand.vmem [shape: f32[1,128], index: 2, kind: input, shape index: {}]
  %s3 = inlined_call_operand.hbm [shape: bf16[128,128], index: 3, kind: input, shape index: {}]
  %s4 = inlined_call_operand.vmem [shape: f32[1,128], index: 4, kind: input, shape index: {}]
  %s5 = inlined_call_operand.hbm [shape: bf16[128,256], index: 5, kind: input, shape index: {}]
  %s6 = inlined_call_operand.vmem [shape: f32[1,256], index: 6, kind: input, shape index: {}]
  %s7 = inlined_call_operand.<no memory space> [shape: f32[1], index: 7, kind: input, shape index: {}]
  %s8 = inlined_call_operand.hbm [shape: f32[8,256], index: 8, kind: output, shape index: {}]
  %s9 = sld [smem:[#allocation0]]
  $region50: #{generator_forward.1} parent=0
    _
  %s11 = ssub.s32 1, %s9
  %s12 = scalar_select 0, %s11, %s9
  %13 = sst [smem:[#allocation2]] %s7
  $region1: #{generator_forward.1} parent=0
    #allocation3 [shape = 'u8[32768]{0}', space=vmem, size = 0x8000, scoped, tag = 'input window, operand 3, single buffered']
    #allocation4 [shape = 's32[1]{0}', space=sflag, size = 0x4, scoped, tag = 'scoped memory for generator_forward.1']
    #allocation5 [shape = 's32[1]{0}', space=sflag, size = 0x4, scoped, tag = 'scoped memory for generator_forward.1']
    #allocation6 [shape = 'u8[65536]{0}', space=vmem, size = 0x10000, scoped, tag = 'input window, operand 5, single buffered']
    #allocation7 [shape = 's32[1]{0}', space=sflag, size = 0x4, scoped, tag = 'scoped memory for generator_forward.1']
    #allocation8 [shape = 'u8[8192]{0}', space=vmem, size = 0x2000, scoped, tag = 'output window, operand 0, single buffered']
    %14 = vsyncpa [#allocation4], 0
    %15 = vsyncpa [#allocation7], 0
    %16 = vsyncpa [#allocation5], 0
    // Predicated region
    $region2: #{generator_forward.1} parent=1 // pred_check
      _
    $region3: #{generator_forward.1} parent=1 // pred_check_branch
      %18 = sbr.rel (0) target = $region5
    $region4: #{generator_forward.1} parent=1 // pred_region
      _
    $region5: #{generator_forward.1} parent=1 // pred_fallthru
      _
    // Predicated region
    $region6: #{generator_forward.1} parent=1 // pred_check
      _
    $region7: #{generator_forward.1} parent=1 // pred_check_branch
      %20 = sbr.rel (0) target = $region9
    $region8: #{generator_forward.1} parent=1 // pred_region
      _
    $region9: #{generator_forward.1} parent=1 // pred_fallthru
      _
    // Predicated region
    $region10: #{generator_forward.1} parent=1 // pred_check
      _
    $region11: #{generator_forward.1} parent=1 // pred_check_branch
      %22 = sbr.rel (0) target = $region13
    $region12: #{generator_forward.1} parent=1 // pred_region
      _
    $region13: #{generator_forward.1} parent=1 // pred_fallthru
      _
    // Predicated region
    $region14: #{generator_forward.1} parent=1 // pred_check
      _
    $region15: #{generator_forward.1} parent=1 // pred_check_branch
      %24 = sbr.rel (0) target = $region17
    $region16: #{generator_forward.1} parent=1 // pred_region
      %s26 = ssub.s32 1024, 1024
      %27 = vsyncadd [#allocation4], %s26
      %s28 = sshll.u32 [#allocation3], 4
      %s29 = int_to_ptr.vmem [resolvable:$true] %s28
      %34 = dma.hbm_to_vmem [thread:$0]  %s3, 1024, %s29, [#allocation4], 64, 64, 4
    $region17: #{generator_forward.1} parent=1 // pred_fallthru
      _
    // Predicated region
    $region18: #{generator_forward.1} parent=1 // pred_check
      _
    $region19: #{generator_forward.1} parent=1 // pred_check_branch
      %36 = sbr.rel (0) target = $region21
    $region20: #{generator_forward.1} parent=1 // pred_region
      _
    $region21: #{generator_forward.1} parent=1 // pred_fallthru
      _
    // Predicated region
    $region22: #{generator_forward.1} parent=1 // pred_check
      _
    $region23: #{generator_forward.1} parent=1 // pred_check_branch
      %38 = sbr.rel (0) target = $region25
    $region24: #{generator_forward.1} parent=1 // pred_region
      %s40 = ssub.s32 2048, 2048
      %41 = vsyncadd [#allocation7], %s40
      %s42 = sshll.u32 [#allocation6], 4
      %s43 = int_to_ptr.vmem [resolvable:$true] %s42
      %48 = dma.hbm_to_vmem [thread:$0]  %s5, 2048, %s43, [#allocation7], 128, 128, 8
    $region25: #{generator_forward.1} parent=1 // pred_fallthru
      _
    // Predicated region
    $region26: #{generator_forward.1} parent=1 // pred_check
      _
    $region27: #{generator_forward.1} parent=1 // pred_check_branch
      %50 = sbr.rel (0) target = $region29
    $region28: #{generator_forward.1} parent=1 // pred_region
      _
    $region29: #{generator_forward.1} parent=1 // pred_fallthru
      _
    // Predicated region
    $region30: #{generator_forward.1} parent=1 // pred_check
      _
    $region31: #{generator_forward.1} parent=1 // pred_check_branch
      %52 = sbr.rel (0) target = $region33
    $region32: #{generator_forward.1} parent=1 // pred_region
      _
    $region33: #{generator_forward.1} parent=1 // pred_fallthru
      _
    // Predicated region
    $region34: #{generator_forward.1} parent=1 // pred_check
      _
    $region35: #{generator_forward.1} parent=1 // pred_check_branch
      %54 = sbr.rel (0) target = $region37
    $region36: #{generator_forward.1} parent=1 // pred_region
      %55 = dma.done [#allocation4], 1024
    $region37: #{generator_forward.1} parent=1 // pred_fallthru
      _
    // Predicated region
    $region38: #{generator_forward.1} parent=1 // pred_check
      _
    $region39: #{generator_forward.1} parent=1 // pred_check_branch
      %57 = sbr.rel (0) target = $region41
    $region40: #{generator_forward.1} parent=1 // pred_region
      %58 = dma.done [#allocation7], 2048
    $region41: #{generator_forward.1} parent=1 // pred_fallthru
      _
    %s60 = sld [smem:[#allocation2]]
    %v61 = vld [vmem:[%s0] sm:$0xff]
    %v62 = vpack.c.bf16 %v61, %v61
    %v63 = vld [vmem:[%s1] sm:$0xf]
    %v64 = vld [vmem:[%s1 + $0x4] sm:$0xf]
    %v65 = vld [vmem:[%s2] sm:$0x1]
    %v67 = vlaneseq
    %v68 = vshrl.u32 %v67, 7
    %v69 = vsub.s32 0, %v68
    %v70 = vrot.slane %v65, %v69
    %v74 = vunpack.c.l.b16 %v63
    %v75 = vunpack.c.l.b16 %v64
    %v76 = vpack.c.b16 %v75, %v74
    %vm78 = vcmask 130048
    %v80 = vsel %vm78, %v62, 0
    %82 = vmatprep.subr.bf16.mxu0 0
    %83 = vmatpush1.bf16.msra.mxu0 0
    %84 = vmatprep.subr.bf16.mxu0 0
    %85 = vmatpush1.bf16.msra.mxu0 0
    %86 = vmatprep.subr.bf16.mxu0 0
    %87 = vmatpush1.bf16.msra.mxu0 0
    %88 = vmatprep.subr.bf16.mxu0 0
    %89 = vmatpush1.bf16.msra.mxu0 0
    %90 = vmatprep.subr.bf16.mxu0 0
    %91 = vmatpush1.bf16.msra.mxu0 0
    %92 = vmatprep.subr.bf16.mxu0 0
    %93 = vmatpush1.bf16.msra.mxu0 0
    %94 = vmatprep.subr.bf16.mxu0 0
    %95 = vmatpush1.bf16.msra.mxu0 0
    %96 = vmatprep.subr.bf16.mxu0 0
    %97 = vmatpush1.bf16.msra.mxu0 %v76
    %98 = vmatprep.subr.bf16.mxu0 0
    %99 = vmatpush2.bf16.msra.mxu0 0
    %100 = vmatprep.subr.bf16.mxu0 0
    %101 = vmatpush2.bf16.msra.mxu0 0
    %102 = vmatprep.subr.bf16.mxu0 0
    %103 = vmatpush2.bf16.msra.mxu0 0
    %104 = vmatprep.subr.bf16.mxu0 0
    %105 = vmatpush2.bf16.msra.mxu0 0
    %106 = vmatprep.subr.bf16.mxu0 0
    %107 = vmatpush2.bf16.msra.mxu0 0
    %108 = vmatprep.subr.bf16.mxu0 0
    %109 = vmatpush2.bf16.msra.mxu0 0
    %110 = vmatprep.subr.bf16.mxu0 0
    %111 = vmatpush2.bf16.msra.mxu0 0
    %112 = vmatprep.subr.bf16.mxu0 0
    %113 = vmatpush2.bf16.msra.mxu0 0
    %114 = vmatprep.mubr.bf16.mxu0 0
    %115 = vmatmul.mubr.bf16.gmra.mxu0 %v80
    %v116 = vpop.f32.mrf.mxu0
    %v117 = vadd.f32 %v70, %v116
    %v118 = vpop.f32.mrf.mxu0
    %v119 = vpop.f32.mrf.mxu0
    %v120 = vpop.f32.mrf.mxu0
    %121 = vdwg.mxu0
    %vm122 = vcmp.gt.f32.partialorder %v117, 0.0
    %v123 = vstv %s60
    %v124 = vmul.f32 %v123, %v117
    %v125 = vsel %vm122, %v117, %v124
    %v126 = vpack.c.bf16 %v125, %v125
    %v127 = vld [vmem:[#allocation3] sm:$0xf]
    %v128 = vld [vmem:[#allocation3 + $0x4] sm:$0xf]
    %v129 = vld [vmem:[#allocation3 + $0x8] sm:$0xf]
    %v130 = vld [vmem:[#allocation3 + $0xc] sm:$0xf]
    %v131 = vld [vmem:[#allocation3 + $0x10] sm:$0xf]
    %v132 = vld [vmem:[#allocation3 + $0x14] sm:$0xf]
    %v133 = vld [vmem:[#allocation3 + $0x18] sm:$0xf]
    %v134 = vld [vmem:[#allocation3 + $0x1c] sm:$0xf]
    %v135 = vld [vmem:[#allocation3 + $0x20] sm:$0xf]
    %v136 = vld [vmem:[#allocation3 + $0x24] sm:$0xf]
    %v137 = vld [vmem:[#allocation3 + $0x28] sm:$0xf]
    %v138 = vld [vmem:[#allocation3 + $0x2c] sm:$0xf]
    %v139 = vld [vmem:[#allocation3 + $0x30] sm:$0xf]
    %v140 = vld [vmem:[#allocation3 + $0x34] sm:$0xf]
    %v141 = vld [vmem:[#allocation3 + $0x38] sm:$0xf]
    %v142 = vld [vmem:[#allocation3 + $0x3c] sm:$0xf]
    %v143 = vld [vmem:[%s4] sm:$0x1]
    %v145 = vlaneseq
    %v146 = vshrl.u32 %v145, 7
    %v147 = vsub.s32 0, %v146
    %v148 = vrot.slane %v143, %v147
    %v166 = vunpack.c.l.b16 %v127
    %v167 = vunpack.c.l.b16 %v128
    %v168 = vunpack.c.l.b16 %v129
    %v169 = vunpack.c.l.b16 %v130
    %v170 = vunpack.c.l.b16 %v131
    %v171 = vunpack.c.l.b16 %v132
    %v172 = vunpack.c.l.b16 %v133
    %v173 = vunpack.c.l.b16 %v134
    %v174 = vunpack.c.l.b16 %v135
    %v175 = vunpack.c.l.b16 %v136
    %v176 = vunpack.c.l.b16 %v137
    %v177 = vunpack.c.l.b16 %v138
    %v178 = vunpack.c.l.b16 %v139
    %v179 = vunpack.c.l.b16 %v140
    %v180 = vunpack.c.l.b16 %v141
    %v181 = vunpack.c.l.b16 %v142
    %v182 = vpack.c.b16 %v167, %v166
    %v183 = vpack.c.b16 %v169, %v168
    %v184 = vpack.c.b16 %v171, %v170
    %v185 = vpack.c.b16 %v173, %v172
    %v186 = vpack.c.b16 %v175, %v174
    %v187 = vpack.c.b16 %v177, %v176
    %v188 = vpack.c.b16 %v179, %v178
    %v189 = vpack.c.b16 %v181, %v180
    %198 = vmatprep.subr.bf16.mxu0 0
    %199 = vmatpush1.bf16.msra.mxu0 %v189
    %200 = vmatprep.subr.bf16.mxu0 0
    %201 = vmatpush1.bf16.msra.mxu0 %v188
    %202 = vmatprep.subr.bf16.mxu0 0
    %203 = vmatpush1.bf16.msra.mxu0 %v187
    %204 = vmatprep.subr.bf16.mxu0 0
    %205 = vmatpush1.bf16.msra.mxu0 %v186
    %206 = vmatprep.subr.bf16.mxu0 0
    %207 = vmatpush1.bf16.msra.mxu0 %v185
    %208 = vmatprep.subr.bf16.mxu0 0
    %209 = vmatpush1.bf16.msra.mxu0 %v184
    %210 = vmatprep.subr.bf16.mxu0 0
    %211 = vmatpush1.bf16.msra.mxu0 %v183
    %212 = vmatprep.subr.bf16.mxu0 0
    %213 = vmatpush1.bf16.msra.mxu0 %v182
    %214 = vmatprep.subr.bf16.mxu0 0
    %215 = vmatpush2.bf16.msra.mxu0 0
    %216 = vmatprep.subr.bf16.mxu0 0
    %217 = vmatpush2.bf16.msra.mxu0 0
    %218 = vmatprep.subr.bf16.mxu0 0
    %219 = vmatpush2.bf16.msra.mxu0 0
    %220 = vmatprep.subr.bf16.mxu0 0
    %221 = vmatpush2.bf16.msra.mxu0 0
    %222 = vmatprep.subr.bf16.mxu0 0
    %223 = vmatpush2.bf16.msra.mxu0 0
    %224 = vmatprep.subr.bf16.mxu0 0
    %225 = vmatpush2.bf16.msra.mxu0 0
    %226 = vmatprep.subr.bf16.mxu0 0
    %227 = vmatpush2.bf16.msra.mxu0 0
    %228 = vmatprep.subr.bf16.mxu0 0
    %229 = vmatpush2.bf16.msra.mxu0 0
    %230 = vmatprep.mubr.bf16.mxu0 0
    %231 = vmatmul.mubr.bf16.gmra.mxu0 %v126
    %v232 = vpop.f32.mrf.mxu0
    %v233 = vadd.f32 %v148, %v232
    %v234 = vpop.f32.mrf.mxu0
    %v235 = vpop.f32.mrf.mxu0
    %v236 = vpop.f32.mrf.mxu0
    %237 = vdwg.mxu0
    %vm238 = vcmp.gt.f32.partialorder %v233, 0.0
    %v239 = vmul.f32 %v123, %v233
    %v240 = vsel %vm238, %v233, %v239
    %v241 = vpack.c.bf16 %v240, %v240
    %v242 = vld [vmem:[#allocation6] sm:$0xff]
    %v243 = vld [vmem:[#allocation6 + $0x8] sm:$0xff]
    %v244 = vld [vmem:[#allocation6 + $0x10] sm:$0xff]
    %v245 = vld [vmem:[#allocation6 + $0x18] sm:$0xff]
    %v246 = vld [vmem:[#allocation6 + $0x20] sm:$0xff]
    %v247 = vld [vmem:[#allocation6 + $0x28] sm:$0xff]
    %v248 = vld [vmem:[#allocation6 + $0x30] sm:$0xff]
    %v249 = vld [vmem:[#allocation6 + $0x38] sm:$0xff]
    %v250 = vld [vmem:[#allocation6 + $0x40] sm:$0xff]
    %v251 = vld [vmem:[#allocation6 + $0x48] sm:$0xff]
    %v252 = vld [vmem:[#allocation6 + $0x50] sm:$0xff]
    %v253 = vld [vmem:[#allocation6 + $0x58] sm:$0xff]
    %v254 = vld [vmem:[#allocation6 + $0x60] sm:$0xff]
    %v255 = vld [vmem:[#allocation6 + $0x68] sm:$0xff]
    %v256 = vld [vmem:[#allocation6 + $0x70] sm:$0xff]
    %v257 = vld [vmem:[#allocation6 + $0x78] sm:$0xff]
    %v258 = vld [vmem:[%s6] sm:$0x3]
    %v260 = vlaneseq
    %v261 = vshrl.u32 %v260, 7
    %v262 = vsub.s32 0, %v261
    %v263 = vrot.slane %v258, %v262
    %v264 = vlaneseq
    %v265 = vshrl.u32 %v264, 7
    %v266 = vsub.s32 1, %v265
    %v267 = vrot.slane %v258, %v266
    %v286 = vunpack.c.l.b16 %v242
    %v287 = vunpack.c.h.b16 %v242
    %v288 = vunpack.c.l.b16 %v243
    %v289 = vunpack.c.h.b16 %v243
    %v290 = vunpack.c.l.b16 %v244
    %v291 = vunpack.c.h.b16 %v244
    %v292 = vunpack.c.l.b16 %v245
    %v293 = vunpack.c.h.b16 %v245
    %v294 = vunpack.c.l.b16 %v246
    %v295 = vunpack.c.h.b16 %v246
    %v296 = vunpack.c.l.b16 %v247
    %v297 = vunpack.c.h.b16 %v247
    %v298 = vunpack.c.l.b16 %v248
    %v299 = vunpack.c.h.b16 %v248
    %v300 = vunpack.c.l.b16 %v249
    %v301 = vunpack.c.h.b16 %v249
    %v302 = vunpack.c.l.b16 %v250
    %v303 = vunpack.c.h.b16 %v250
    %v304 = vunpack.c.l.b16 %v251
    %v305 = vunpack.c.h.b16 %v251
    %v306 = vunpack.c.l.b16 %v252
    %v307 = vunpack.c.h.b16 %v252
    %v308 = vunpack.c.l.b16 %v253
    %v309 = vunpack.c.h.b16 %v253
    %v310 = vunpack.c.l.b16 %v254
    %v311 = vunpack.c.h.b16 %v254
    %v312 = vunpack.c.l.b16 %v255
    %v313 = vunpack.c.h.b16 %v255
    %v314 = vunpack.c.l.b16 %v256
    %v315 = vunpack.c.h.b16 %v256
    %v316 = vunpack.c.l.b16 %v257
    %v317 = vunpack.c.h.b16 %v257
    %v318 = vpack.c.b16 %v288, %v286
    %v319 = vpack.c.b16 %v289, %v287
    %v320 = vpack.c.b16 %v292, %v290
    %v321 = vpack.c.b16 %v293, %v291
    %v322 = vpack.c.b16 %v296, %v294
    %v323 = vpack.c.b16 %v297, %v295
    %v324 = vpack.c.b16 %v300, %v298
    %v325 = vpack.c.b16 %v301, %v299
    %v326 = vpack.c.b16 %v304, %v302
    %v327 = vpack.c.b16 %v305, %v303
    %v328 = vpack.c.b16 %v308, %v306
    %v329 = vpack.c.b16 %v309, %v307
    %v330 = vpack.c.b16 %v312, %v310
    %v331 = vpack.c.b16 %v313, %v311
    %v332 = vpack.c.b16 %v316, %v314
    %v333 = vpack.c.b16 %v317, %v315
    %350 = vmatprep.subr.bf16.mxu0 %v333
    %351 = vmatpush1.bf16.msra.mxu0 %v332
    %352 = vmatprep.subr.bf16.mxu0 %v331
    %353 = vmatpush1.bf16.msra.mxu0 %v330
    %354 = vmatprep.subr.bf16.mxu0 %v329
    %355 = vmatpush1.bf16.msra.mxu0 %v328
    %356 = vmatprep.subr.bf16.mxu0 %v327
    %357 = vmatpush1.bf16.msra.mxu0 %v326
    %358 = vmatprep.subr.bf16.mxu0 %v325
    %359 = vmatpush1.bf16.msra.mxu0 %v324
    %360 = vmatprep.subr.bf16.mxu0 %v323
    %361 = vmatpush1.bf16.msra.mxu0 %v322
    %362 = vmatprep.subr.bf16.mxu0 %v321
    %363 = vmatpush1.bf16.msra.mxu0 %v320
    %364 = vmatprep.subr.bf16.mxu0 %v319
    %365 = vmatpush1.bf16.msra.mxu0 %v318
    %366 = vmatprep.subr.bf16.mxu0 0
    %367 = vmatpush2.bf16.msra.mxu0 0
    %368 = vmatprep.subr.bf16.mxu0 0
    %369 = vmatpush2.bf16.msra.mxu0 0
    %370 = vmatprep.subr.bf16.mxu0 0
    %371 = vmatpush2.bf16.msra.mxu0 0
    %372 = vmatprep.subr.bf16.mxu0 0
    %373 = vmatpush2.bf16.msra.mxu0 0
    %374 = vmatprep.subr.bf16.mxu0 0
    %375 = vmatpush2.bf16.msra.mxu0 0
    %376 = vmatprep.subr.bf16.mxu0 0
    %377 = vmatpush2.bf16.msra.mxu0 0
    %378 = vmatprep.subr.bf16.mxu0 0
    %379 = vmatpush2.bf16.msra.mxu0 0
    %380 = vmatprep.subr.bf16.mxu0 0
    %381 = vmatpush2.bf16.msra.mxu0 0
    %382 = vmatprep.mubr.bf16.mxu0 0
    %383 = vmatmul.mubr.bf16.gmra.mxu0 %v241
    %v384 = vpop.f32.mrf.mxu0
    %v385 = vadd.f32 %v263, %v384
    %v386 = vpop.f32.mrf.mxu0
    %v387 = vadd.f32 %v267, %v386
    %v388 = vpop.f32.mrf.mxu0
    %v389 = vpop.f32.mrf.mxu0
    %390 = vdwg.mxu0
    %391 = vst [vmem:[#allocation8] sm:$0xff] %v385
    %392 = vst [vmem:[#allocation8 + $0x8] sm:$0xff] %v387
    // Predicated region
    $region42: #{generator_forward.1} parent=1 // pred_check
      _
    $region43: #{generator_forward.1} parent=1 // pred_check_branch
      %394 = sbr.rel (0) target = $region45
    $region44: #{generator_forward.1} parent=1 // pred_region
      %s396 = ssub.s32 256, 256
      %397 = vsyncadd [#allocation5], %s396
      %s399 = sshll.u32 [#allocation8], 4
      %s400 = int_to_ptr.vmem [resolvable:$true] %s399
      %402 = dma.vmem_to_hbm [thread:$0]  %s400, 256, %s8, [#allocation5]
    $region45: #{generator_forward.1} parent=1 // pred_fallthru
      _
    // Predicated region
    $region46: #{generator_forward.1} parent=1 // pred_check
      _
    $region47: #{generator_forward.1} parent=1 // pred_check_branch
      %404 = sbr.rel (0) target = $region49
    $region48: #{generator_forward.1} parent=1 // pred_region
      %405 = dma.done [#allocation5], 256
    $region49: #{generator_forward.1} parent=1 // pred_fallthru
      _
    %406 = vsyncpa [#allocation4], 1
    %407 = vsyncpa [#allocation7], 1
    %408 = vsyncpa [#allocation5], 1

</llo_original>
